<compile_context>
chip_gen: v5e
topology: v5e:2x2
jax: 0.10.0
libtpu: 0.0.40
codegen_flags: <defaults>
</compile_context>

<pallas_src>
import jax
import jax.numpy as jnp
from jax.experimental import pallas as pl
from jax.experimental.pallas import tpu as pltpu


def _round_up(x, m):
    return ((x + m - 1) // m) * m


def _vmem_capacity_bytes():
    """Physical VMEM per TensorCore, with a conservative fallback."""
    try:
        info = pltpu.get_tpu_info()
        cap = getattr(info, "vmem_capacity_bytes", None)
        if cap is None or cap <= 0:
            cap = 64 * 1024 * 1024
    except Exception:
        cap = 64 * 1024 * 1024          # v7x-safe fallback
    return int(cap)


def prepare_linear_params(w, b):
    """One-time (model-init) weight pad + bf16 cast and bias pad.

    w: (H, H) f32 in (in, out) layout;  b: (H,)
    Returns wp: (Hp, Hp) bf16, bp: (1, Hp) f32.
    """
    H = w.shape[0]
    Hp = _round_up(H, 128)
    wp = w if Hp == H else jnp.pad(w, ((0, Hp - H), (0, Hp - H)))
    wp = wp.astype(jnp.bfloat16)
    bp = b if Hp == H else jnp.pad(b, (0, Hp - H))
    bp = bp.reshape(1, Hp).astype(jnp.float32)
    return wp, bp


def residual_linear_kernel(x_ref, w_ref, b_ref, o_ref, xb_ref):
    """One (tm, tn) output tile of  y = x + (x @ W + b).

    x_ref : (tm, Hp) f32   full contraction slab (resident across the N axis)
    w_ref : (Hp, tn) bf16  weight column tile
    b_ref : (1,  tn) f32   bias tile
    o_ref : (tm, tn) f32
    xb_ref: (tm, Hp) bf16  scratch: x cast once per row tile (j == 0 only)
    """
    tn = o_ref.shape[-1]

    # Cast the x slab to bf16 exactly once per row tile (j is the inner,
    # "arbitrary" grid axis, so every core that runs j>0 also ran j==0).
    @pl.when(pl.program_id(1) == 0)
    def _():
        xb_ref[...] = x_ref[...].astype(jnp.bfloat16)

    # MXU matmul in bf16 with f32 accumulation; bias add in f32.
    y = jnp.dot(xb_ref[...], w_ref[...], preferred_element_type=jnp.float32)
    y = y + b_ref[...]

    # Residual add in exact f32 against the matching column slab of x.
    if x_ref.shape[-1] == tn:
        x_res = x_ref[...]                                   # single N tile
    else:
        col = pl.multiple_of(pl.program_id(1) * tn, 128)
        x_res = x_ref[:, pl.ds(col, tn)]
    o_ref[...] = (x_res + y).astype(o_ref.dtype)


def residual_block(x, wp, bp, *, tm=512, tn=512):
    """y = x + (x @ W + b), fused in a single Pallas kernel.

    x : (B, S, H) f32
    wp: (Hp, Hp) bf16 pre-padded weight (from prepare_linear_params)
    bp: (1, Hp)  f32  pre-padded bias
    """
    B, S, H = x.shape
    M = B * S
    Hp = wp.shape[0]

    # Row tile: multiple of 8 (f32 sublanes), clamped for small M.
    tm_eff = min(tm, _round_up(M, 8))
    tn_eff = min(tn, Hp)                     # multiple of 128

    vmem_cap = int(_vmem_capacity_bytes() * 0.85)

    def _estimate(tm_):
        return (2 * tm_ * Hp * 4             # x f32 slabs (double-buffered)
                + tm_ * Hp * 2                # bf16 x scratch
                + 2 * Hp * tn_eff * 2         # weight tiles (bf16)
                + 2 * tm_ * tn_eff * 4        # out tiles (f32)
                + 4 * tn_eff * 4)             # bias tiles

    # Shrink tm if the estimate would blow past the per-core VMEM cap (v7x).
    while tm_eff > 64 and _estimate(tm_eff) > vmem_cap:
        tm_eff = max(64, _round_up(tm_eff // 2, 8))

    Mp = _round_up(M, tm_eff)

    # Skip activation padding when already aligned (common case).
    x2 = x.reshape(M, H)
    if (Mp, Hp) != (M, H):
        x2 = jnp.pad(x2, ((0, Mp - M), (0, Hp - H)))

    grid = (Mp // tm_eff, Hp // tn_eff)

    est = _estimate(tm_eff)
    vmem_limit = min(vmem_cap, max(32 * 1024 * 1024, int(est * 1.5)))

    out = pl.pallas_call(
        residual_linear_kernel,
        out_shape=jax.ShapeDtypeStruct((Mp, Hp), x.dtype),
        grid_spec=pltpu.PrefetchScalarGridSpec(
            num_scalar_prefetch=0,
            grid=grid,
            in_specs=[
                pl.BlockSpec((tm_eff, Hp), lambda i, j: (i, 0)),    # x K-slab
                pl.BlockSpec((Hp, tn_eff), lambda i, j: (0, j)),    # weight tile
                pl.BlockSpec((1, tn_eff), lambda i, j: (0, j)),     # bias tile
            ],
            out_specs=pl.BlockSpec((tm_eff, tn_eff), lambda i, j: (i, j)),
            scratch_shapes=[pltpu.VMEM((tm_eff, Hp), jnp.bfloat16)],
        ),
        compiler_params=pltpu.CompilerParams(
            # j must stay un-split (the j==0 cast feeds all j on the same core).
            dimension_semantics=("parallel", "arbitrary"),
            vmem_limit_bytes=vmem_limit,
        ),
    )(x2, wp, bp)

    if (Mp, Hp) != (M, H):
        out = out[:M, :H]
    return out.reshape(B, S, H)


def reference(x, w, b):
    return x + (jnp.einsum("bsh,hk->bsk", x, w) + b)


if __name__ == "__main__":
    B, S, H = 2, 8, 32
    key = jax.random.PRNGKey(0)
    kx, kw, kb = jax.random.split(key, 3)

    # Deterministic parameter init (PyTorch nn.Linear-style uniform bound 1/sqrt(H)).
    bound = 1.0 / (H ** 0.5)
    x = jax.random.normal(kx, (B, S, H), dtype=jnp.float32)
    w = jax.random.uniform(kw, (H, H), minval=-bound, maxval=bound, dtype=jnp.float32)
    b = jax.random.uniform(kb, (H,), minval=-bound, maxval=bound, dtype=jnp.float32)

    # One-time (model-init) parameter preparation, hoisted out of the call path.
    wp, bp = prepare_linear_params(w, b)

    y = residual_block(x, wp, bp)
    y = jax.block_until_ready(y)

    y_ref = reference(x, w, b)
    # bf16 matmul operands with f32 accumulate + exact f32 residual.
    assert jnp.allclose(y, y_ref, atol=2e-2, rtol=2e-2), "mismatch vs reference"
    print("KERNEL_OK")
</pallas_src>

<mosaic_0001>
module attributes {stable_mosaic.version = 11 : i64} {
  func.func @residual_linear_kernel(%arg0: i32, %arg1: i32, %arg2: memref<16x128xf32, #tpu.memory_space<vmem>>, %arg3: memref<128x128xbf16, #tpu.memory_space<vmem>>, %arg4: memref<1x128xf32, #tpu.memory_space<vmem>>, %arg5: memref<16x128xf32, #tpu.memory_space<vmem>>, %arg6: memref<16x128xbf16, #tpu.memory_space<vmem>>) attributes {dimension_semantics = [#tpu.dimension_semantics<parallel>, #tpu.dimension_semantics<arbitrary>], iteration_bounds = array<i64: 1, 1>, scalar_prefetch = 0 : i64, scratch_operands = 1 : i64, tpu.core_type = #tpu.core_type<tc>, window_params = [{transform_indices = @transform_0, window_bounds = array<i64: 16, 128>}, {transform_indices = @transform_1, window_bounds = array<i64: 128, 128>}, {transform_indices = @transform_2, window_bounds = array<i64: 1, 128>}, {transform_indices = @transform_3, window_bounds = array<i64: 16, 128>}]} {
    %c0_i32 = arith.constant 0 : i32
    %0 = arith.cmpi eq, %arg1, %c0_i32 : i32
    %1 = arith.extui %0 : i1 to i32
    %c0_i32_0 = arith.constant 0 : i32
    %2 = arith.cmpi ne, %1, %c0_i32_0 : i32
    scf.if %2 {
      %c0_10 = arith.constant 0 : index
      %c0_11 = arith.constant 0 : index
      %12 = vector.load %arg2[%c0_10, %c0_11] : memref<16x128xf32, #tpu.memory_space<vmem>>, vector<16x128xf32>
      %13 = arith.truncf %12 : vector<16x128xf32> to vector<16x128xbf16>
      %c0_12 = arith.constant 0 : index
      %c0_13 = arith.constant 0 : index
      %14 = vector.load %arg6[%c0_12, %c0_13] : memref<16x128xbf16, #tpu.memory_space<vmem>>, vector<16x128xbf16>
      tpu.vector_store %arg6[%c0_12, %c0_13], %13 {strides = array<i32>} : memref<16x128xbf16, #tpu.memory_space<vmem>>, vector<16x128xbf16>,
    } else {
    }
    %c0 = arith.constant 0 : index
    %c0_1 = arith.constant 0 : index
    %3 = vector.load %arg6[%c0, %c0_1] : memref<16x128xbf16, #tpu.memory_space<vmem>>, vector<16x128xbf16>
    %c0_2 = arith.constant 0 : index
    %c0_3 = arith.constant 0 : index
    %4 = vector.load %arg3[%c0_2, %c0_3] : memref<128x128xbf16, #tpu.memory_space<vmem>>, vector<128x128xbf16>
    %cst = arith.constant dense<0.000000e+00> : vector<16x128xf32>
    %5 = tpu.matmul %3, %4, %cst {dimension_numbers = #tpu.dot_dimension_numbers<[1], [0], [0], [1], [0, 0, 1, 1], [], []>} : vector<16x128xbf16>, vector<128x128xbf16>, vector<16x128xf32> -> vector<16x128xf32>
    %c0_4 = arith.constant 0 : index
    %c0_5 = arith.constant 0 : index
    %6 = vector.load %arg4[%c0_4, %c0_5] : memref<1x128xf32, #tpu.memory_space<vmem>>, vector<1x128xf32>
    %7 = vector.broadcast %6 : vector<1x128xf32> to vector<16x128xf32>
    %8 = arith.addf %5, %7 : vector<16x128xf32>
    %c0_6 = arith.constant 0 : index
    %c0_7 = arith.constant 0 : index
    %9 = vector.load %arg2[%c0_6, %c0_7] : memref<16x128xf32, #tpu.memory_space<vmem>>, vector<16x128xf32>
    %10 = arith.addf %9, %8 : vector<16x128xf32>
    %c0_8 = arith.constant 0 : index
    %c0_9 = arith.constant 0 : index
    %11 = vector.load %arg5[%c0_8, %c0_9] : memref<16x128xf32, #tpu.memory_space<vmem>>, vector<16x128xf32>
    tpu.vector_store %arg5[%c0_8, %c0_9], %10 {strides = array<i32>} : memref<16x128xf32, #tpu.memory_space<vmem>>, vector<16x128xf32>,
    return
  }
  func.func @transform_0(%arg0: i32, %arg1: i32) -> (i32, i32) {
    %c0_i32 = arith.constant 0 : i32
    %c0_i32_0 = arith.constant 0 : i32
    return %arg0, %c0_i32 : i32, i32
  }
  func.func @transform_1(%arg0: i32, %arg1: i32) -> (i32, i32) {
    %c0_i32 = arith.constant 0 : i32
    %c0_i32_0 = arith.constant 0 : i32
    return %c0_i32, %arg1 : i32, i32
  }
  func.func @transform_2(%arg0: i32, %arg1: i32) -> (i32, i32) {
    %c0_i32 = arith.constant 0 : i32
    %c0_i32_0 = arith.constant 0 : i32
    return %c0_i32, %arg1 : i32, i32
  }
  func.func @transform_3(%arg0: i32, %arg1: i32) -> (i32, i32) {
    %c0_i32 = arith.constant 0 : i32
    return %arg0, %arg1 : i32, i32
  }
}

</mosaic_0001>

<llo_original>
// kernel: tpu_custom_call.1
$region0: #{tpu_custom_call.1}
  #allocation0 [shape = 'u32[]', space=smem, size = 0x4, offset = 0x4, fixed_abs, tag = 'smem constant byte address 0x4 - core index']
  #allocation1 [shape = 'u32[72,128]{1,0:T(1,128)}', space=vmem, size = 0x9000, scoped, tag = 'internal scratch']
  #allocation2 [shape = 'bf16[16,128]{1,0:T(8,128)(2,1)}', space=vmem, size = 0x1000, scoped, tag = 'scratch operand']
  %s0 = inlined_call_operand.hbm [shape: f32[16,128], index: 0, kind: input, shape index: {}]
  %s1 = inlined_call_operand.hbm [shape: bf16[128,128], index: 1, kind: input, shape index: {}]
  %s2 = inlined_call_operand.vmem [shape: f32[1,128], index: 2, kind: input, shape index: {}]
  %s3 = inlined_call_operand.hbm [shape: f32[16,128], index: 3, kind: output, shape index: {}]
  %s4 = sld [smem:[#allocation0]]
  $region34: #{tpu_custom_call.1} parent=0
    _
  %s6 = ssub.s32 1, %s4
  %s7 = scalar_select 0, %s6, %s4
  $region1: #{tpu_custom_call.1} parent=0
    #allocation3 [shape = 'u8[8192]{0}', space=vmem, size = 0x2000, scoped, tag = 'input window, operand 0, single buffered']
    #allocation4 [shape = 's32[1]{0}', space=sflag, size = 0x4, scoped, tag = 'scoped memory for tpu_custom_call.1']
    #allocation5 [shape = 's32[1]{0}', space=sflag, size = 0x4, scoped, tag = 'scoped memory for tpu_custom_call.1']
    #allocation6 [shape = 'u8[32768]{0}', space=vmem, size = 0x8000, scoped, tag = 'input window, operand 1, single buffered']
    #allocation7 [shape = 's32[1]{0}', space=sflag, size = 0x4, scoped, tag = 'scoped memory for tpu_custom_call.1']
    #allocation8 [shape = 'u8[8192]{0}', space=vmem, size = 0x2000, scoped, tag = 'output window, operand 0, single buffered']
    %8 = vsyncpa [#allocation4], 0
    %9 = vsyncpa [#allocation7], 0
    %10 = vsyncpa [#allocation5], 0
    // Predicated region
    $region2: #{tpu_custom_call.1} parent=1 // pred_check
      _
    $region3: #{tpu_custom_call.1} parent=1 // pred_check_branch
      %12 = sbr.rel (0) target = $region5
    $region4: #{tpu_custom_call.1} parent=1 // pred_region
      %14 = vsyncadd [#allocation4], 0
      %s15 = sshll.u32 %s0, 4
      %s16 = int_to_ptr.hbm [resolvable:$true] %s15
      %s17 = sshll.u32 [#allocation3], 4
      %s18 = int_to_ptr.vmem [resolvable:$true] %s17
      %23 = dma.hbm_to_vmem [thread:$0]  %s16, 256, %s18, [#allocation4], 128, 128, 8
    $region5: #{tpu_custom_call.1} parent=1 // pred_fallthru
      _
    // Predicated region
    $region6: #{tpu_custom_call.1} parent=1 // pred_check
      _
    $region7: #{tpu_custom_call.1} parent=1 // pred_check_branch
      %25 = sbr.rel (0) target = $region9
    $region8: #{tpu_custom_call.1} parent=1 // pred_region
      %27 = vsyncadd [#allocation7], 0
      %s28 = sshll.u32 %s1, 4
      %s29 = int_to_ptr.hbm [resolvable:$true] %s28
      %s30 = sshll.u32 [#allocation6], 4
      %s31 = int_to_ptr.vmem [resolvable:$true] %s30
      %36 = dma.hbm_to_vmem [thread:$0]  %s29, 1024, %s31, [#allocation7], 64, 64, 4
    $region9: #{tpu_custom_call.1} parent=1 // pred_fallthru
      _
    // Predicated region
    $region10: #{tpu_custom_call.1} parent=1 // pred_check
      _
    $region11: #{tpu_custom_call.1} parent=1 // pred_check_branch
      %38 = sbr.rel (0) target = $region13
    $region12: #{tpu_custom_call.1} parent=1 // pred_region
      _
    $region13: #{tpu_custom_call.1} parent=1 // pred_fallthru
      _
    // Predicated region
    $region14: #{tpu_custom_call.1} parent=1 // pred_check
      _
    $region15: #{tpu_custom_call.1} parent=1 // pred_check_branch
      %40 = sbr.rel (0) target = $region17
    $region16: #{tpu_custom_call.1} parent=1 // pred_region
      %42 = dma.done [#allocation4], 256
    $region17: #{tpu_custom_call.1} parent=1 // pred_fallthru
      _
    // Predicated region
    $region18: #{tpu_custom_call.1} parent=1 // pred_check
      _
    $region19: #{tpu_custom_call.1} parent=1 // pred_check_branch
      %44 = sbr.rel (0) target = $region21
    $region20: #{tpu_custom_call.1} parent=1 // pred_region
      %46 = dma.done [#allocation7], 1024
    $region21: #{tpu_custom_call.1} parent=1 // pred_fallthru
      _
    %p47 = scmp.eq.s32.totalorder 0, 0
    // Predicated region
    $region22: #{tpu_custom_call.1} parent=1 // pred_check
      %p48 = pneg %p47
    $region23: #{tpu_custom_call.1} parent=1 // pred_check_branch
      %50 = sbr.rel (%p48) target = $region25
    $region24: #{tpu_custom_call.1} parent=1 // pred_region
      %v51 = vld [vmem:[#allocation3] sm:$0xff]
      %v52 = vld [vmem:[#allocation3 + $0x8] sm:$0xff]
      %v53 = vpack.c.bf16 %v51, %v51
      %v54 = vpack.c.bf16 %v52, %v52
      %55 = vst [vmem:[#allocation2] sm:$0xf] %v53
      %56 = vst [vmem:[#allocation2 + $0x4] sm:$0xf] %v54
    $region25: #{tpu_custom_call.1} parent=1 // pred_fallthru
      _
    %v57 = vld [vmem:[#allocation2] sm:$0xf]
    %v58 = vld [vmem:[#allocation2 + $0x4] sm:$0xf]
    %v59 = vld [vmem:[#allocation6] sm:$0xf]
    %v60 = vld [vmem:[#allocation6 + $0x4] sm:$0xf]
    %v61 = vld [vmem:[#allocation6 + $0x8] sm:$0xf]
    %v62 = vld [vmem:[#allocation6 + $0xc] sm:$0xf]
    %v63 = vld [vmem:[#allocation6 + $0x10] sm:$0xf]
    %v64 = vld [vmem:[#allocation6 + $0x14] sm:$0xf]
    %v65 = vld [vmem:[#allocation6 + $0x18] sm:$0xf]
    %v66 = vld [vmem:[#allocation6 + $0x1c] sm:$0xf]
    %v67 = vld [vmem:[#allocation6 + $0x20] sm:$0xf]
    %v68 = vld [vmem:[#allocation6 + $0x24] sm:$0xf]
    %v69 = vld [vmem:[#allocation6 + $0x28] sm:$0xf]
    %v70 = vld [vmem:[#allocation6 + $0x2c] sm:$0xf]
    %v71 = vld [vmem:[#allocation6 + $0x30] sm:$0xf]
    %v72 = vld [vmem:[#allocation6 + $0x34] sm:$0xf]
    %v73 = vld [vmem:[#allocation6 + $0x38] sm:$0xf]
    %v74 = vld [vmem:[#allocation6 + $0x3c] sm:$0xf]
    %v75 = vld [vmem:[%s2] sm:$0x1]
    %v77 = vperm.slane %v75, 0
    %v81 = vunpack.c.l.b16 %v57
    %v82 = vunpack.c.l.b16 %v58
    %v83 = vpack.c.b16 %v82, %v81
    %v101 = vunpack.c.l.b16 %v59
    %v102 = vunpack.c.l.b16 %v60
    %v103 = vunpack.c.l.b16 %v61
    %v104 = vunpack.c.l.b16 %v62
    %v105 = vunpack.c.l.b16 %v63
    %v106 = vunpack.c.l.b16 %v64
    %v107 = vunpack.c.l.b16 %v65
    %v108 = vunpack.c.l.b16 %v66
    %v109 = vunpack.c.l.b16 %v67
    %v110 = vunpack.c.l.b16 %v68
    %v111 = vunpack.c.l.b16 %v69
    %v112 = vunpack.c.l.b16 %v70
    %v113 = vunpack.c.l.b16 %v71
    %v114 = vunpack.c.l.b16 %v72
    %v115 = vunpack.c.l.b16 %v73
    %v116 = vunpack.c.l.b16 %v74
    %v117 = vpack.c.b16 %v102, %v101
    %v118 = vpack.c.b16 %v104, %v103
    %v119 = vpack.c.b16 %v106, %v105
    %v120 = vpack.c.b16 %v108, %v107
    %v121 = vpack.c.b16 %v110, %v109
    %v122 = vpack.c.b16 %v112, %v111
    %v123 = vpack.c.b16 %v114, %v113
    %v124 = vpack.c.b16 %v116, %v115
    %133 = vmatpush.bf16.msra.mxu0 %v124
    %134 = vmatpush.bf16.msra.mxu0 %v123
    %135 = vmatpush.bf16.msra.mxu0 %v122
    %136 = vmatpush.bf16.msra.mxu0 %v121
    %137 = vmatpush.bf16.msra.mxu0 %v120
    %138 = vmatpush.bf16.msra.mxu0 %v119
    %139 = vmatpush.bf16.msra.mxu0 %v118
    %140 = vmatpush.bf16.msra.mxu0 %v117
    %141 = vmatmul.bf16.gmra.mxu0 %v83
    %v142 = vpop.f32.mrf.mxu0
    %v143 = vadd.f32 %v77, %v142
    %v144 = vpop.f32.mrf.mxu0
    %v145 = vadd.f32 %v77, %v144
    %146 = vdwg.mxu0
    %v147 = vld [vmem:[#allocation3] sm:$0xff]
    %v148 = vld [vmem:[#allocation3 + $0x8] sm:$0xff]
    %v149 = vadd.f32 %v147, %v143
    %v150 = vadd.f32 %v148, %v145
    %151 = vst [vmem:[#allocation8] sm:$0xff] %v149
    %152 = vst [vmem:[#allocation8 + $0x8] sm:$0xff] %v150
    // Predicated region
    $region26: #{tpu_custom_call.1} parent=1 // pred_check
      _
    $region27: #{tpu_custom_call.1} parent=1 // pred_check_branch
      %154 = sbr.rel (0) target = $region29
    $region28: #{tpu_custom_call.1} parent=1 // pred_region
      %156 = vsyncadd [#allocation5], 0
      %s157 = sshll.u32 [#allocation8], 4
      %s158 = int_to_ptr.vmem [resolvable:$true] %s157
      %s159 = sshll.u32 %s3, 4
      %s160 = int_to_ptr.hbm [resolvable:$true] %s159
      %165 = dma.vmem_to_hbm [thread:$0]  %s158, 256, %s160, [#allocation5], 128, 128, 8
    $region29: #{tpu_custom_call.1} parent=1 // pred_fallthru
      _
    // Predicated region
    $region30: #{tpu_custom_call.1} parent=1 // pred_check
      _
    $region31: #{tpu_custom_call.1} parent=1 // pred_check_branch
      %167 = sbr.rel (0) target = $region33
    $region32: #{tpu_custom_call.1} parent=1 // pred_region
      %169 = dma.done [#allocation5], 256
    $region33: #{tpu_custom_call.1} parent=1 // pred_fallthru
      _
    %170 = vsyncpa [#allocation4], 1
    %171 = vsyncpa [#allocation7], 1
    %172 = vsyncpa [#allocation5], 1

</llo_original>
